<compile_context>
chip_gen: v6e
topology: v6e:2x2x1
jax: 0.10.0
libtpu: 0.0.40
codegen_flags: <defaults>
</compile_context>

<pallas_src>
import functools

import jax
import jax.numpy as jnp
from jax.experimental import pallas as pl
from jax.experimental.pallas import tpu as pltpu


def _soft_f5_stats_kernel(logits_ref, labels_ref, out_ref,
                          tp_ref, sp_ref, cnt_ref,
                          *, n_total, tile, s_steps):
    p = pl.program_id(0)
    s = pl.program_id(1)

    @pl.when(s == 0)
    def _():
        tp_ref[...] = jnp.zeros_like(tp_ref)
        sp_ref[...] = jnp.zeros_like(sp_ref)
        cnt_ref[...] = jnp.zeros_like(cnt_ref)

    logits = logits_ref[...].astype(jnp.float32)        # (t, C)
    labels = labels_ref[...]                            # (t, 1) int32
    t, c = logits.shape

    # Global row index of each local row.  `valid` implements the [1:-1] slice
    # of the reference AND gates garbage rows of a padded / OOB partial last
    # tile (use jnp.where, not multiplication, so NaN garbage cannot leak).
    tile_idx = p * s_steps + s
    gpos = tile_idx * tile + jax.lax.broadcasted_iota(jnp.int32, (t, 1), 0)
    valid = (gpos >= 1) & (gpos <= n_total - 2)          # (t, 1) bool

    # One-hot match from integer labels; class ids are in [0, C) so the ignore
    # label (-100) never matches -> no extra compare needed.
    class_ids = jax.lax.broadcasted_iota(jnp.int32, (t, c), 1)
    hit = (labels == class_ids) & valid                  # (t, c) bool

    probs = jax.nn.sigmoid(logits)                       # EUP
    mp = jnp.where(valid, probs, 0.0)                    # masked probs (NaN-safe)
    tp_part = jnp.where(hit, probs, 0.0)                 # hit implies valid
    cnt_part = hit.astype(jnp.float32)

    # Reduce (t, C) -> (8, C) with plain vector adds (tile is always a
    # multiple of 8); the single cross-sublane reduction happens in the
    # wrapper finalize.
    def fold(x):
        return x.reshape(t // 8, 8, c).sum(axis=0)

    tp_ref[...] += fold(tp_part)
    sp_ref[...] += fold(mp)
    cnt_ref[...] += fold(cnt_part)

    @pl.when(s == s_steps - 1)
    def _():
        out_ref[0, 0] = tp_ref[...]
        out_ref[0, 1] = sp_ref[...]
        out_ref[0, 2] = cnt_ref[...]


def soft_f5_loss(logits, labels, smooth=1e-16, *, max_tile_rows=2048):
    """logits: [N, C] float (f32 or bf16); labels: [N] int (may contain -100)."""
    N, C = logits.shape
    labels2d = labels.astype(jnp.int32).reshape(N, 1)

    # Row tile: largest multiple of 8 such that one logits buffer stays under
    # ~4 MiB (double-buffered -> ~8 MiB), capped at `max_tile_rows`.
    bytes_per_row = C * jnp.dtype(logits.dtype).itemsize
    cap = int((4 * 1024 * 1024) // max(bytes_per_row, 1))
    cap = max(8, min(max_tile_rows, (cap // 8) * 8))

    if N <= cap:
        # Single tile: round rows up to a multiple of 8 with an explicit
        # (cheap, small) pad so the kernel always sees an 8-aligned tile.
        tile = ((N + 7) // 8) * 8
        if tile != N:
            logits = jnp.pad(logits, ((0, tile - N), (0, 0)))
            labels2d = jnp.pad(labels2d, ((0, tile - N), (0, 0)),
                               constant_values=-100)
    else:
        tile = cap  # multiple of 8; partial last tile handled by the mask.

    n_rows = logits.shape[0]
    total_tiles = pl.cdiv(n_rows, tile)
    # Two-way split along a "parallel" outer grid axis so v7x's second
    # TensorCore gets half the rows; harmless (sequential) on v5e/v6e.
    p_shards = 2 if (total_tiles >= 2 and total_tiles % 2 == 0) else 1
    s_steps = total_tiles // p_shards

    kernel = functools.partial(_soft_f5_stats_kernel,
                               n_total=N, tile=tile, s_steps=s_steps)

    stats = pl.pallas_call(
        kernel,
        out_shape=jax.ShapeDtypeStruct((p_shards, 3, 8, C), jnp.float32),
        grid_spec=pltpu.PrefetchScalarGridSpec(
            num_scalar_prefetch=0,
            grid=(p_shards, s_steps),
            in_specs=[
                pl.BlockSpec((tile, C), lambda p, s: (p * s_steps + s, 0)),
                pl.BlockSpec((tile, 1), lambda p, s: (p * s_steps + s, 0)),
            ],
            out_specs=pl.BlockSpec((1, 3, 8, C), lambda p, s: (p, 0, 0, 0)),
            scratch_shapes=[
                pltpu.VMEM((8, C), jnp.float32),
                pltpu.VMEM((8, C), jnp.float32),
                pltpu.VMEM((8, C), jnp.float32),
            ],
        ),
        compiler_params=pltpu.CompilerParams(
            dimension_semantics=("parallel", "arbitrary"),
            vmem_limit_bytes=32 * 1024 * 1024,
        ),
    )(logits, labels2d)

    # Tiny finalize on O(P*C) data: fold shards + sublanes, form soft-F5.
    tp = stats[:, 0].sum(axis=(0, 1))        # (C,)
    sum_p = stats[:, 1].sum(axis=(0, 1))     # (C,)
    cnt = stats[:, 2].sum(axis=(0, 1))       # (C,)
    fp = sum_p - tp
    fn = cnt - tp
    soft_f5 = (1.0 + 5.0 ** 2) * tp / (5.0 ** 2 * tp + fn + fp + smooth)
    return jnp.mean(1.0 - soft_f5)


def _reference(logits, labels, smooth=1e-16):
    N, C = logits.shape
    one_hot = jnp.where(
        (labels[:, None] == jnp.arange(C)[None, :]) & (labels[:, None] != -100),
        1.0, 0.0).astype(jnp.float32)
    probs = jax.nn.sigmoid(logits.astype(jnp.float32))
    probs = probs[1:-1]
    one_hot = one_hot[1:-1]
    tp = jnp.sum(probs * one_hot, axis=0)
    fp = jnp.sum(probs * (1.0 - one_hot), axis=0)
    fn = jnp.sum((1.0 - probs) * one_hot, axis=0)
    soft_f5 = (1.0 + 25.0) * tp / (25.0 * tp + fn + fp + smooth)
    return jnp.mean(1.0 - soft_f5)


if __name__ == "__main__":
    key = jax.random.PRNGKey(0)

    def make_case(k, n, c):
        k1, k2, k3 = jax.random.split(k, 3)
        logits = jax.random.normal(k1, (n, c), dtype=jnp.float32)
        labels = jax.random.randint(k2, (n,), 0, c, dtype=jnp.int32)
        ignore = jax.random.bernoulli(k3, 0.25, (n,))
        return logits, jnp.where(ignore, -100, labels)

    k0, k1, k2 = jax.random.split(key, 3)

    # Main small case matching the module spec: seq=8, classes=32.
    logits, labels = make_case(k0, 8, 32)
    out = jax.block_until_ready(soft_f5_loss(logits, labels))
    ref = jax.block_until_ready(_reference(logits, labels))
    assert jnp.allclose(out, ref, atol=1e-5, rtol=1e-5), (out, ref)

    # Multi-tile + parallel-shard + partial-last-tile path (force tiny tiles).
    logits, labels = make_case(k1, 45, 32)
    out = jax.block_until_ready(soft_f5_loss(logits, labels, max_tile_rows=8))
    ref = jax.block_until_ready(_reference(logits, labels))
    assert jnp.allclose(out, ref, atol=1e-5, rtol=1e-5), (out, ref)

    # Non-multiple-of-8 single-tile path (wrapper-side pad to 8 rows).
    logits, labels = make_case(k2, 6, 32)
    out = jax.block_until_ready(soft_f5_loss(logits, labels))
    ref = jax.block_until_ready(_reference(logits, labels))
    assert jnp.allclose(out, ref, atol=1e-5, rtol=1e-5), (out, ref)

    print("KERNEL_OK")
</pallas_src>

<mosaic_0001>
module attributes {stable_mosaic.version = 11 : i64} {
  func.func @_soft_f5_stats_kernel(%arg0: i32, %arg1: i32, %arg2: memref<8x32xf32, #tpu.memory_space<vmem>>, %arg3: memref<8x1xi32, #tpu.memory_space<vmem>>, %arg4: memref<1x3x8x32xf32, #tpu.memory_space<vmem>>, %arg5: memref<8x32xf32, #tpu.memory_space<vmem>>, %arg6: memref<8x32xf32, #tpu.memory_space<vmem>>, %arg7: memref<8x32xf32, #tpu.memory_space<vmem>>) attributes {dimension_semantics = [#tpu.dimension_semantics<parallel>, #tpu.dimension_semantics<arbitrary>], iteration_bounds = array<i64: 1, 1>, scalar_prefetch = 0 : i64, scratch_operands = 3 : i64, tpu.core_type = #tpu.core_type<tc>, window_params = [{transform_indices = @transform_0, window_bounds = array<i64: 8, 32>}, {transform_indices = @transform_1, window_bounds = array<i64: 8, 1>}, {transform_indices = @transform_2, window_bounds = array<i64: 1, 3, 8, 32>}]} {
    %c0_i32 = arith.constant 0 : i32
    %0 = arith.cmpi eq, %arg1, %c0_i32 : i32
    %1 = arith.extui %0 : i1 to i32
    %c0_i32_0 = arith.constant 0 : i32
    %2 = arith.cmpi ne, %1, %c0_i32_0 : i32
    scf.if %2 {
      %cst_24 = arith.constant 0.000000e+00 : f32
      %52 = vector.broadcast %cst_24 : f32 to vector<8x32xf32>
      %c0_25 = arith.constant 0 : index
      %c0_26 = arith.constant 0 : index
      %53 = vector.load %arg5[%c0_25, %c0_26] : memref<8x32xf32, #tpu.memory_space<vmem>>, vector<8x32xf32>
      tpu.vector_store %arg5[%c0_25, %c0_26], %52 {strides = array<i32>} : memref<8x32xf32, #tpu.memory_space<vmem>>, vector<8x32xf32>,
      %cst_27 = arith.constant 0.000000e+00 : f32
      %54 = vector.broadcast %cst_27 : f32 to vector<8x32xf32>
      %c0_28 = arith.constant 0 : index
      %c0_29 = arith.constant 0 : index
      %55 = vector.load %arg6[%c0_28, %c0_29] : memref<8x32xf32, #tpu.memory_space<vmem>>, vector<8x32xf32>
      tpu.vector_store %arg6[%c0_28, %c0_29], %54 {strides = array<i32>} : memref<8x32xf32, #tpu.memory_space<vmem>>, vector<8x32xf32>,
      %cst_30 = arith.constant 0.000000e+00 : f32
      %56 = vector.broadcast %cst_30 : f32 to vector<8x32xf32>
      %c0_31 = arith.constant 0 : index
      %c0_32 = arith.constant 0 : index
      %57 = vector.load %arg7[%c0_31, %c0_32] : memref<8x32xf32, #tpu.memory_space<vmem>>, vector<8x32xf32>
      tpu.vector_store %arg7[%c0_31, %c0_32], %56 {strides = array<i32>} : memref<8x32xf32, #tpu.memory_space<vmem>>, vector<8x32xf32>,
    } else {
    }
    %c0 = arith.constant 0 : index
    %c0_1 = arith.constant 0 : index
    %3 = vector.load %arg2[%c0, %c0_1] : memref<8x32xf32, #tpu.memory_space<vmem>>, vector<8x32xf32>
    %c0_2 = arith.constant 0 : index
    %c0_3 = arith.constant 0 : index
    %4 = vector.load %arg3[%c0_2, %c0_3] : memref<8x1xi32, #tpu.memory_space<vmem>>, vector<8x1xi32>
    %c1_i32 = arith.constant 1 : i32
    %5 = arith.muli %arg0, %c1_i32 : i32
    %6 = arith.addi %5, %arg1 : i32
    %c8_i32 = arith.constant 8 : i32
    %7 = arith.muli %6, %c8_i32 : i32
    %8 = tpu.iota {dimensions = array<i32: 0>} : vector<8x1xi32>
    %9 = vector.broadcast %7 : i32 to vector<8x1xi32>
    %10 = arith.addi %9, %8 : vector<8x1xi32>
    %c1_i32_4 = arith.constant 1 : i32
    %11 = vector.broadcast %c1_i32_4 : i32 to vector<8x1xi32>
    %12 = arith.cmpi sge, %10, %11 : vector<8x1xi32>
    %c6_i32 = arith.constant 6 : i32
    %13 = vector.broadcast %c6_i32 : i32 to vector<8x1xi32>
    %14 = arith.cmpi sle, %10, %13 : vector<8x1xi32>
    %15 = arith.andi %12, %14 : vector<8x1xi1>
    %16 = tpu.iota {dimensions = array<i32: 1>} : vector<8x32xi32>
    %17 = vector.broadcast %4 : vector<8x1xi32> to vector<8x32xi32>
    %18 = arith.cmpi eq, %17, %16 : vector<8x32xi32>
    %19 = vector.broadcast %15 : vector<8x1xi1> to vector<8x32xi1>
    %20 = arith.andi %18, %19 : vector<8x32xi1>
    %21 = arith.negf %3 : vector<8x32xf32>
    %22 = math.exp %21 : vector<8x32xf32>
    %cst = arith.constant 1.000000e+00 : f32
    %23 = vector.broadcast %cst : f32 to vector<8x32xf32>
    %24 = arith.addf %23, %22 : vector<8x32xf32>
    %25 = arith.divf %23, %24 : vector<8x32xf32>
    %cst_5 = arith.constant 0.000000e+00 : f32
    %26 = vector.shape_cast %15 : vector<8x1xi1> to vector<8x1xi1>
    %27 = vector.broadcast %26 : vector<8x1xi1> to vector<8x32xi1>
    %28 = vector.broadcast %cst_5 : f32 to vector<8x32xf32>
    %29 = arith.select %27, %25, %28 : vector<8x32xi1>, vector<8x32xf32>
    %cst_6 = arith.constant 0.000000e+00 : f32
    %30 = vector.broadcast %cst_6 : f32 to vector<8x32xf32>
    %31 = arith.select %20, %25, %30 : vector<8x32xi1>, vector<8x32xf32>
    %32 = arith.extui %20 : vector<8x32xi1> to vector<8x32xi32>
    %33 = arith.sitofp %32 : vector<8x32xi32> to vector<8x32xf32>
    %c0_7 = arith.constant 0 : index
    %c0_8 = arith.constant 0 : index
    %34 = vector.load %arg5[%c0_7, %c0_8] : memref<8x32xf32, #tpu.memory_space<vmem>>, vector<8x32xf32>
    %35 = vector.shape_cast %31 : vector<8x32xf32> to vector<1x8x32xf32>
    %cst_9 = arith.constant dense<0.000000e+00> : vector<8x32xf32>
    %36 = vector.multi_reduction <add>, %35, %cst_9 [0] : vector<1x8x32xf32> to vector<8x32xf32>
    %37 = arith.addf %34, %36 : vector<8x32xf32>
    %c0_10 = arith.constant 0 : index
    %c0_11 = arith.constant 0 : index
    %38 = vector.load %arg5[%c0_10, %c0_11] : memref<8x32xf32, #tpu.memory_space<vmem>>, vector<8x32xf32>
    tpu.vector_store %arg5[%c0_10, %c0_11], %37 {strides = array<i32>} : memref<8x32xf32, #tpu.memory_space<vmem>>, vector<8x32xf32>,
    %c0_12 = arith.constant 0 : index
    %c0_13 = arith.constant 0 : index
    %39 = vector.load %arg6[%c0_12, %c0_13] : memref<8x32xf32, #tpu.memory_space<vmem>>, vector<8x32xf32>
    %40 = vector.shape_cast %29 : vector<8x32xf32> to vector<1x8x32xf32>
    %cst_14 = arith.constant dense<0.000000e+00> : vector<8x32xf32>
    %41 = vector.multi_reduction <add>, %40, %cst_14 [0] : vector<1x8x32xf32> to vector<8x32xf32>
    %42 = arith.addf %39, %41 : vector<8x32xf32>
    %c0_15 = arith.constant 0 : index
    %c0_16 = arith.constant 0 : index
    %43 = vector.load %arg6[%c0_15, %c0_16] : memref<8x32xf32, #tpu.memory_space<vmem>>, vector<8x32xf32>
    tpu.vector_store %arg6[%c0_15, %c0_16], %42 {strides = array<i32>} : memref<8x32xf32, #tpu.memory_space<vmem>>, vector<8x32xf32>,
    %c0_17 = arith.constant 0 : index
    %c0_18 = arith.constant 0 : index
    %44 = vector.load %arg7[%c0_17, %c0_18] : memref<8x32xf32, #tpu.memory_space<vmem>>, vector<8x32xf32>
    %45 = vector.shape_cast %33 : vector<8x32xf32> to vector<1x8x32xf32>
    %cst_19 = arith.constant dense<0.000000e+00> : vector<8x32xf32>
    %46 = vector.multi_reduction <add>, %45, %cst_19 [0] : vector<1x8x32xf32> to vector<8x32xf32>
    %47 = arith.addf %44, %46 : vector<8x32xf32>
    %c0_20 = arith.constant 0 : index
    %c0_21 = arith.constant 0 : index
    %48 = vector.load %arg7[%c0_20, %c0_21] : memref<8x32xf32, #tpu.memory_space<vmem>>, vector<8x32xf32>
    tpu.vector_store %arg7[%c0_20, %c0_21], %47 {strides = array<i32>} : memref<8x32xf32, #tpu.memory_space<vmem>>, vector<8x32xf32>,
    %c0_i32_22 = arith.constant 0 : i32
    %49 = arith.cmpi eq, %arg1, %c0_i32_22 : i32
    %50 = arith.extui %49 : i1 to i32
    %c0_i32_23 = arith.constant 0 : i32
    %51 = arith.cmpi ne, %50, %c0_i32_23 : i32
    scf.if %51 {
      %c0_24 = arith.constant 0 : index
      %c0_25 = arith.constant 0 : index
      %52 = vector.load %arg5[%c0_24, %c0_25] : memref<8x32xf32, #tpu.memory_space<vmem>>, vector<8x32xf32>
      %c0_26 = arith.constant 0 : index
      %c0_27 = arith.constant 0 : index
      %c0_28 = arith.constant 0 : index
      %c0_29 = arith.constant 0 : index
      %53 = vector.load %arg4[%c0_26, %c0_27, %c0_28, %c0_29] : memref<1x3x8x32xf32, #tpu.memory_space<vmem>>, vector<1x1x8x32xf32>
      %54 = vector.shape_cast %53 : vector<1x1x8x32xf32> to vector<8x32xf32>
      %55 = vector.shape_cast %52 : vector<8x32xf32> to vector<1x1x8x32xf32>
      tpu.vector_store %arg4[%c0_26, %c0_27, %c0_28, %c0_29], %55 {strides = array<i32>} : memref<1x3x8x32xf32, #tpu.memory_space<vmem>>, vector<1x1x8x32xf32>,
      %c0_30 = arith.constant 0 : index
      %c0_31 = arith.constant 0 : index
      %56 = vector.load %arg6[%c0_30, %c0_31] : memref<8x32xf32, #tpu.memory_space<vmem>>, vector<8x32xf32>
      %c0_32 = arith.constant 0 : index
      %c1 = arith.constant 1 : index
      %c0_33 = arith.constant 0 : index
      %c0_34 = arith.constant 0 : index
      %57 = vector.load %arg4[%c0_32, %c1, %c0_33, %c0_34] : memref<1x3x8x32xf32, #tpu.memory_space<vmem>>, vector<1x1x8x32xf32>
      %58 = vector.shape_cast %57 : vector<1x1x8x32xf32> to vector<8x32xf32>
      %59 = vector.shape_cast %56 : vector<8x32xf32> to vector<1x1x8x32xf32>
      tpu.vector_store %arg4[%c0_32, %c1, %c0_33, %c0_34], %59 {strides = array<i32>} : memref<1x3x8x32xf32, #tpu.memory_space<vmem>>, vector<1x1x8x32xf32>,
      %c0_35 = arith.constant 0 : index
      %c0_36 = arith.constant 0 : index
      %60 = vector.load %arg7[%c0_35, %c0_36] : memref<8x32xf32, #tpu.memory_space<vmem>>, vector<8x32xf32>
      %c0_37 = arith.constant 0 : index
      %c2 = arith.constant 2 : index
      %c0_38 = arith.constant 0 : index
      %c0_39 = arith.constant 0 : index
      %61 = vector.load %arg4[%c0_37, %c2, %c0_38, %c0_39] : memref<1x3x8x32xf32, #tpu.memory_space<vmem>>, vector<1x1x8x32xf32>
      %62 = vector.shape_cast %61 : vector<1x1x8x32xf32> to vector<8x32xf32>
      %63 = vector.shape_cast %60 : vector<8x32xf32> to vector<1x1x8x32xf32>
      tpu.vector_store %arg4[%c0_37, %c2, %c0_38, %c0_39], %63 {strides = array<i32>} : memref<1x3x8x32xf32, #tpu.memory_space<vmem>>, vector<1x1x8x32xf32>,
    } else {
    }
    return
  }
  func.func @transform_0(%arg0: i32, %arg1: i32) -> (i32, i32) {
    %c1_i32 = arith.constant 1 : i32
    %0 = arith.muli %arg0, %c1_i32 : i32
    %1 = arith.addi %0, %arg1 : i32
    %c0_i32 = arith.constant 0 : i32
    %c0_i32_0 = arith.constant 0 : i32
    return %1, %c0_i32 : i32, i32
  }
  func.func @transform_1(%arg0: i32, %arg1: i32) -> (i32, i32) {
    %c1_i32 = arith.constant 1 : i32
    %0 = arith.muli %arg0, %c1_i32 : i32
    %1 = arith.addi %0, %arg1 : i32
    %c0_i32 = arith.constant 0 : i32
    %c0_i32_0 = arith.constant 0 : i32
    return %1, %c0_i32 : i32, i32
  }
  func.func @transform_2(%arg0: i32, %arg1: i32) -> (i32, i32, i32, i32) {
    %c0_i32 = arith.constant 0 : i32
    %c0_i32_0 = arith.constant 0 : i32
    %c0_i32_1 = arith.constant 0 : i32
    %c0_i32_2 = arith.constant 0 : i32
    return %arg0, %c0_i32, %c0_i32_0, %c0_i32_1 : i32, i32, i32, i32
  }
}

</mosaic_0001>

<llo_original>
// kernel: tpu_custom_call.1
$region0: #{tpu_custom_call.1}
  #allocation0 [shape = 'u32[]', space=smem, size = 0x4, offset = 0x4, fixed_abs, tag = 'smem constant byte address 0x4 - core index']
  #allocation1 [shape = 'u32[144,128]{1,0:T(1,128)}', space=vmem, size = 0x12000, scoped, tag = 'internal scratch']
  #allocation2 [shape = 'f32[8,32]{1,0:T(8,128)}', space=vmem, size = 0x1000, scoped, tag = 'scratch operand']
  #allocation3 [shape = 'f32[8,32]{1,0:T(8,128)}', space=vmem, size = 0x1000, scoped, tag = 'scratch operand']
  #allocation4 [shape = 'f32[8,32]{1,0:T(8,128)}', space=vmem, size = 0x1000, scoped, tag = 'scratch operand']
  %s0 = inlined_call_operand.vmem [shape: f32[8,32], index: 0, kind: input, shape index: {}]
  %s1 = inlined_call_operand.vmem [shape: s32[8,1], index: 1, kind: input, shape index: {}]
  %s2 = inlined_call_operand.hbm [shape: f32[1,3,8,32], index: 2, kind: output, shape index: {}]
  %s3 = sld [smem:[#allocation0]]
  $region26: #{tpu_custom_call.1} parent=0
    _
  %s5 = ssub.s32 1, %s3
  %s6 = scalar_select 0, %s5, %s3
  $region1: #{tpu_custom_call.1} parent=0
    #allocation5 [shape = 'u8[12288]{0}', space=vmem, size = 0x3000, scoped, tag = 'output window, operand 0, single buffered']
    #allocation6 [shape = 's32[1]{0}', space=sflag, size = 0x4, scoped, tag = 'scoped memory for tpu_custom_call.1']
    %7 = vsyncpa [#allocation6], 0
    // Predicated region
    $region2: #{tpu_custom_call.1} parent=1 // pred_check
      _
    $region3: #{tpu_custom_call.1} parent=1 // pred_check_branch
      %9 = sbr.rel (0) target = $region5
    $region4: #{tpu_custom_call.1} parent=1 // pred_region
      %s10 = sadd.s32 0, 0
      %p11 = scmp.lt.s32.totalorder %s10, 0
      %s12 = scalar_select %p11, %s10, 0
      %s13 = smul.addr %s12, 8
      %s14 = scalar_lea.vmem %s0, %s13
      %s15 = sadd.s32 0, 0
    $region5: #{tpu_custom_call.1} parent=1 // pred_fallthru
      _
    // Predicated region
    $region6: #{tpu_custom_call.1} parent=1 // pred_check
      _
    $region7: #{tpu_custom_call.1} parent=1 // pred_check_branch
      %17 = sbr.rel (0) target = $region9
    $region8: #{tpu_custom_call.1} parent=1 // pred_region
      %s18 = sadd.s32 0, 0
      %p19 = scmp.lt.s32.totalorder %s18, 0
      %s20 = scalar_select %p19, %s18, 0
      %s21 = smul.addr %s20, 8
      %s22 = scalar_lea.vmem %s1, %s21
      %s23 = sadd.s32 0, 0
    $region9: #{tpu_custom_call.1} parent=1 // pred_fallthru
      _
    %s24 = sadd.s32 0, 0
    %p25 = scmp.lt.s32.totalorder %s24, 0
    %s26 = scalar_select %p25, %s24, 0
    %s27 = smul.addr %s26, 8
    %s28 = scalar_lea.vmem %s0, %s27
    %s29 = sadd.s32 0, 0
    %p30 = scmp.lt.s32.totalorder %s29, 0
    %s31 = scalar_select %p30, %s29, 0
    %s32 = smul.addr %s31, 8
    %s33 = scalar_lea.vmem %s1, %s32
    %s34 = sadd.s32 0, 0
    %p35 = scmp.lt.s32.totalorder %s34, 0
    %s36 = scalar_select %p35, %s34, 0
    %s37 = smul.addr %s36, 8
    %s38 = scalar_lea.vmem %s0, %s37
    %s39 = sadd.s32 0, 0
    %s40 = sadd.s32 0, 0
    %p41 = scmp.lt.s32.totalorder %s40, 0
    %s42 = scalar_select %p41, %s40, 0
    %s43 = smul.addr %s42, 8
    %s44 = scalar_lea.vmem %s1, %s43
    %s45 = sadd.s32 0, 0
    %p46 = scmp.eq.s32.totalorder 0, 0
    // Predicated region
    $region10: #{tpu_custom_call.1} parent=1 // pred_check
      %p47 = pneg %p46
    $region11: #{tpu_custom_call.1} parent=1 // pred_check_branch
      %49 = sbr.rel (%p47) target = $region13
    $region12: #{tpu_custom_call.1} parent=1 // pred_region
      %vm50 = vcmask 261120
      %51 = vst.msk [vmem:[#allocation2] sm:$0xff] %vm50, 0.0
      %52 = vst.msk [vmem:[#allocation3] sm:$0xff] %vm50, 0.0
      %53 = vst.msk [vmem:[#allocation4] sm:$0xff] %vm50, 0.0
    $region13: #{tpu_custom_call.1} parent=1 // pred_fallthru
      _
    %v54 = vld [vmem:[%s38] sm:$0xff]
    %v55 = vld [vmem:[%s44] sm:$0xff]
    %s56 = sadd.s32 0, 0
    %s57 = smul.u32 %s56, 8
    %v58 = vlaneseq
    %v59 = vshrl.u32 %v58, 7
    %v60 = vstv %s57
    %v61 = vadd.s32 %v60, %v59
    %vm62 = vcmp.ge.s32.totalorder %v61, 1
    %vm63 = vcmp.le.s32.totalorder %v61, 6
    %vm64 = vmand %vm62, %vm63
    %v65 = vlaneseq
    %v66 = vand.u32 %v65, 127
    %67 = vset.pattern.permute.xlu0 0
    %68 = vperm.xlu0 %67, %v55
    %v69 = vpop.permute.xlu0 %68
    %vm70 = vcmp.eq.s32.totalorder %v69, %v66
    %v71 = vsel %vm64, 1, 0
    %vm72 = vcmp.eq.s32.totalorder %v71, 1
    %vm73 = vmand %vm70, %vm72
    %v74 = vxor.u32 %v54, 2147483648
    %v75 = vmul.f32 %v74, 1.442695
    %v76 = vpow.pop %v75
    %v77 = vadd.f32 %v76, 1.0
    %v78 = vrcp.pop %v77
    %v79 = vmul.f32 1.0, %v78
    %v80 = vsel %vm72, %v79, 0.0
    %v81 = vsel %vm73, %v79, 0.0
    %v82 = vsel %vm73, 1, 0
    %v83 = vcvt.s32.f32 %v82
    %v84 = vld [vmem:[#allocation2] sm:$0xff]
    %v85 = vadd.f32 %v81, 0.0
    %v86 = vadd.f32 %v84, %v85
    %vm87 = vcmask 261120
    %88 = vst.msk [vmem:[#allocation2] sm:$0xff] %vm87, %v86
    %v89 = vld [vmem:[#allocation3] sm:$0xff]
    %v90 = vadd.f32 %v80, 0.0
    %v91 = vadd.f32 %v89, %v90
    %92 = vst.msk [vmem:[#allocation3] sm:$0xff] %vm87, %v91
    %v93 = vld [vmem:[#allocation4] sm:$0xff]
    %v94 = vadd.f32 %v83, 0.0
    %v95 = vadd.f32 %v93, %v94
    %96 = vst.msk [vmem:[#allocation4] sm:$0xff] %vm87, %v95
    // Predicated region
    $region14: #{tpu_custom_call.1} parent=1 // pred_check
      %p97 = pneg %p46
    $region15: #{tpu_custom_call.1} parent=1 // pred_check_branch
      %99 = sbr.rel (%p97) target = $region17
    $region16: #{tpu_custom_call.1} parent=1 // pred_region
      %v100 = vld [vmem:[#allocation2] sm:$0xff]
      %101 = vst.msk [vmem:[#allocation5] sm:$0xff] %vm87, %v100
      %v102 = vld [vmem:[#allocation3] sm:$0xff]
      %s103 = scalar_lea.vmem [#allocation5], 8
      %104 = vst.msk [vmem:[%s103] sm:$0xff] %vm87, %v102
      %v105 = vld [vmem:[#allocation4] sm:$0xff]
      %s106 = scalar_lea.vmem [#allocation5], 16
      %107 = vst.msk [vmem:[%s106] sm:$0xff] %vm87, %v105
    $region17: #{tpu_custom_call.1} parent=1 // pred_fallthru
      _
    // Predicated region
    $region18: #{tpu_custom_call.1} parent=1 // pred_check
      _
    $region19: #{tpu_custom_call.1} parent=1 // pred_check_branch
      %109 = sbr.rel (0) target = $region21
    $region20: #{tpu_custom_call.1} parent=1 // pred_region
      %s111 = ssub.s32 384, 384
      %112 = vsyncadd [#allocation6], %s111
      %s113 = sshll.u32 [#allocation5], 4
      %s114 = int_to_ptr.vmem [resolvable:$true] %s113
      %119 = dma.vmem_to_hbm [thread:$0]  %s114, 384, %s2, [#allocation6], 128, 128, 8
    $region21: #{tpu_custom_call.1} parent=1 // pred_fallthru
      _
    // Predicated region
    $region22: #{tpu_custom_call.1} parent=1 // pred_check
      _
    $region23: #{tpu_custom_call.1} parent=1 // pred_check_branch
      %121 = sbr.rel (0) target = $region25
    $region24: #{tpu_custom_call.1} parent=1 // pred_region
      %122 = dma.done [#allocation6], 384
    $region25: #{tpu_custom_call.1} parent=1 // pred_fallthru
      _
    %123 = vsyncpa [#allocation6], 1

</llo_original>
